<compile_context>
chip_gen: v7x
topology: tpu7x:2x2x1
jax: 0.10.0
libtpu: 0.0.40
codegen_flags: <defaults>
</compile_context>

<pallas_src>
import functools

import jax
import jax.numpy as jnp
from jax.experimental import pallas as pl
from jax.experimental.pallas import tpu as pltpu

_EPS = 1e-5


def _round_up_128(n):
    return ((n + 127) // 128) * 128


def _dqn_kernel(apply_bn, out_size, dims, x_ref, w1_ref, wbig_ref, vec_ref, o_ref):
    hid_p, h2_p, out_p = dims

    def vrow(r, width):
        # one packed (1, width) f32 vector (bias / gamma / beta); static, lane-aligned.
        return vec_ref[r:r + 1, :width]

    def dense(h_bf16, w_bf16, bias):
        # bf16 operands feed the native MXU path; accumulate in f32.
        return jnp.dot(h_bf16, w_bf16, preferred_element_type=jnp.float32) + bias

    def relu_bn_cast(h, g, be):
        # relu, then training-mode BatchNorm1d (batch mean + biased batch variance),
        # then a single cast to bf16 for the next MXU matmul.
        h = jnp.maximum(h, 0.0)
        if apply_bn:
            mu = jnp.mean(h, axis=0, keepdims=True)
            ms = jnp.mean(h * h, axis=0, keepdims=True)
            var = jnp.maximum(ms - mu * mu, 0.0)          # guard f32 rounding
            scale = g * jax.lax.rsqrt(var + _EPS)         # rsqrt -> EUP slot
            shift = be - mu * scale
            h = h * scale + shift
        # TODO(synk): on v6e/v7x this FMA could run in bf16 (bf16-capable VALU).
        return h.astype(jnp.bfloat16)

    # layer 1: x is already bf16 (wrapper-cast), w1 is its own operand (different rows).
    h = relu_bn_cast(dense(x_ref[...], w1_ref[...], vrow(0, hid_p)),
                     vrow(1, hid_p), vrow(2, hid_p))
    # TODO(synk): dropout(0.2) -> identity

    # layers 2-4 read static, tile-aligned views of the packed [hid_p, hid_p+h2_p+out_p]
    # weight slab (all lane offsets are multiples of 128; row slice is a multiple of 128).
    h = relu_bn_cast(dense(h, wbig_ref[:, :hid_p], vrow(3, hid_p)),
                     vrow(4, hid_p), vrow(5, hid_p))
    # dropout -> identity

    h = relu_bn_cast(dense(h, wbig_ref[:, hid_p:hid_p + h2_p], vrow(6, h2_p)),
                     vrow(7, h2_p), vrow(8, h2_p))

    q = dense(h, wbig_ref[:h2_p, hid_p + h2_p:hid_p + h2_p + out_p], vrow(9, out_p))

    # lane-dense (width out_p, multiple of 128) unmasked store; padded lanes are filled
    # with float32.min so a consumer-side argmax over the whole slab is safe and the
    # wrapper-side [:, :out_size] slice can be skipped.
    lane = jax.lax.broadcasted_iota(jnp.int32, q.shape, 1)
    q = jnp.where(lane < out_size, q, jnp.finfo(jnp.float32).min)
    o_ref[...] = q.astype(o_ref.dtype)


def _vmem_limit_bytes(b_pad, packed):
    hid_p, h2_p, out_p = packed["hid_p"], packed["h2_p"], packed["out_p"]
    f_max, in_size = packed["f_max"], packed["in_size"]
    bf16, f32 = 2, 4
    weights = in_size * hid_p * bf16 + hid_p * (hid_p + h2_p + out_p) * bf16
    vectors = 10 * f_max * f32
    io_bytes = b_pad * in_size * bf16 + b_pad * out_p * f32
    acts = 4 * b_pad * max(hid_p, h2_p, out_p) * f32   # live f32 activations/temps
    est = weights + vectors + io_bytes + acts
    # 2x headroom for compiler temporaries; floor at 8 MiB; stay below v7x's 64 MiB/TC
    # physical VMEM (configs beyond that need a K-/batch-tiled grid instead).
    return int(min(max(2 * est + (2 << 20), 8 << 20), 60 << 20))


def _pallas_forward_2d(x, packed, padded_output=False):
    """x: [B, input_size]. Whole MLP in one grid-less pallas_call."""
    B = x.shape[0]
    apply_bn = B > 1                     # mirrors `if x.size(0) > 1` in PyTorch
    # Pad the sublane (batch) axis only when BN is skipped: pad rows flow through
    # fc1's bias and would otherwise bias the batch statistics.
    B_pad = B if apply_bn else max(8, ((B + 7) // 8) * 8)

    x_in = x.astype(jnp.bfloat16)        # bf16 input path (halves the x DMA)
    if B_pad != B:
        x_in = jnp.pad(x_in, ((0, B_pad - B), (0, 0)))

    dims = (packed["hid_p"], packed["h2_p"], packed["out_p"])
    kernel = functools.partial(_dqn_kernel, apply_bn, packed["out_size"], dims)

    out = pl.pallas_call(
        kernel,
        out_shape=jax.ShapeDtypeStruct((B_pad, packed["out_p"]), jnp.float32),
        in_specs=[pl.BlockSpec(memory_space=pltpu.MemorySpace.VMEM)] * 4,
        out_specs=pl.BlockSpec(memory_space=pltpu.MemorySpace.VMEM),
        compiler_params=pltpu.CompilerParams(
            vmem_limit_bytes=_vmem_limit_bytes(B_pad, packed)),
    )(x_in, packed["w1"], packed["wbig"], packed["vec"])

    if B_pad != B:
        out = out[:B]
    if padded_output:
        return out                        # [B, out_p]; padded lanes = float32.min
    return out[:, :packed["out_size"]]


def dqn_network_forward(x, packed, padded_output=False):
    """Mirrors DQNNetwork.forward, including the 1-D single-state path."""
    if x.ndim == 1:
        return _pallas_forward_2d(x[None, :], packed, padded_output)[0]
    return _pallas_forward_2d(x, packed, padded_output)


def _init_params(key, input_size, output_size, hidden_size):
    """Logical (unpadded, f32) params mimicking PyTorch defaults:
    uniform +-1/sqrt(fan_in) for Linear, gamma=1 / beta=0 for BatchNorm.
    Linear weights stored [in_features, out_features] so y = x @ W + b."""
    def linear(key, fan_in, fan_out):
        kw, kb = jax.random.split(key)
        bound = 1.0 / jnp.sqrt(jnp.float32(fan_in))
        w = jax.random.uniform(kw, (fan_in, fan_out), jnp.float32, -bound, bound)
        b = jax.random.uniform(kb, (fan_out,), jnp.float32, -bound, bound)
        return w, b

    h2 = hidden_size // 2
    k1, k2, k3, k4 = jax.random.split(key, 4)
    w1, b1 = linear(k1, input_size, hidden_size)
    w2, b2 = linear(k2, hidden_size, hidden_size)
    w3, b3 = linear(k3, hidden_size, h2)
    w4, b4 = linear(k4, h2, output_size)
    return {
        "w1": w1, "b1": b1,
        "g1": jnp.ones((hidden_size,), jnp.float32),
        "be1": jnp.zeros((hidden_size,), jnp.float32),
        "w2": w2, "b2": b2,
        "g2": jnp.ones((hidden_size,), jnp.float32),
        "be2": jnp.zeros((hidden_size,), jnp.float32),
        "w3": w3, "b3": b3,
        "g3": jnp.ones((h2,), jnp.float32),
        "be3": jnp.zeros((h2,), jnp.float32),
        "w4": w4, "b4": b4,
    }


def _pack_params(params):
    """Kernel-side layout:
      * w1: [in, hid_p] bf16 (own operand; different row count)
      * wbig: [hid_p, hid_p + h2_p + out_p] bf16 = w2 | w3 | w4(rows zero-padded to hid_p)
      * vec: [10, F_MAX] f32 = all biases + BN gamma/beta stacked
    Zero padding is numerically inert through linear / ReLU / BN."""
    w1, w2, w3, w4 = params["w1"], params["w2"], params["w3"], params["w4"]
    in_size = w1.shape[0]
    hid, h2, out = w1.shape[1], w3.shape[1], w4.shape[1]
    hid_p, h2_p, out_p = _round_up_128(hid), _round_up_128(h2), _round_up_128(out)
    f_max = max(hid_p, h2_p, out_p)

    def pad2(w, rows, cols):
        return jnp.pad(w, ((0, rows - w.shape[0]), (0, cols - w.shape[1])))

    w1p = pad2(w1, in_size, hid_p).astype(jnp.bfloat16)
    wbig = jnp.concatenate(
        [pad2(w2, hid_p, hid_p),
         pad2(w3, hid_p, h2_p),
         pad2(w4, hid_p, out_p)],        # rows h2_p -> hid_p zero-padded; kernel slices [:h2_p]
        axis=1).astype(jnp.bfloat16)

    def pad_v(v):
        return jnp.pad(v, (0, f_max - v.shape[0]))

    vec = jnp.stack([
        pad_v(params["b1"]), pad_v(params["g1"]), pad_v(params["be1"]),
        pad_v(params["b2"]), pad_v(params["g2"]), pad_v(params["be2"]),
        pad_v(params["b3"]), pad_v(params["g3"]), pad_v(params["be3"]),
        pad_v(params["b4"]),
    ]).astype(jnp.float32)                                  # [10, F_MAX]

    return {
        "w1": w1p, "wbig": wbig, "vec": vec,
        "in_size": in_size, "hid_p": hid_p, "h2_p": h2_p, "out_p": out_p,
        "f_max": f_max, "out_size": out,
    }


def _reference_forward(x, params):
    """Pure-JAX f32 reference (PyTorch-equivalent math). Weights are rounded
    through bf16 so only the kernel's activation rounding differs."""
    def bn(h, g, be):
        mu = jnp.mean(h, axis=0, keepdims=True)
        var = jnp.mean((h - mu) ** 2, axis=0, keepdims=True)
        return g * (h - mu) / jnp.sqrt(var + _EPS) + be

    w = lambda k: params[k].astype(jnp.bfloat16).astype(jnp.float32)
    apply_bn = x.shape[0] > 1
    h = jnp.maximum(x @ w("w1") + params["b1"], 0.0)
    if apply_bn:
        h = bn(h, params["g1"], params["be1"])
    h = jnp.maximum(h @ w("w2") + params["b2"], 0.0)
    if apply_bn:
        h = bn(h, params["g2"], params["be2"])
    h = jnp.maximum(h @ w("w3") + params["b3"], 0.0)
    if apply_bn:
        h = bn(h, params["g3"], params["be3"])
    return h @ w("w4") + params["b4"]


if __name__ == "__main__":
    INPUT_SIZE = 16
    OUTPUT_SIZE = 4
    HIDDEN_SIZE = 32
    BATCH = 8

    root = jax.random.PRNGKey(0)
    k_params, k_x = jax.random.split(root)
    params = _init_params(k_params, INPUT_SIZE, OUTPUT_SIZE, HIDDEN_SIZE)
    packed = _pack_params(params)
    x = jax.random.normal(k_x, (BATCH, INPUT_SIZE), jnp.float32)

    # batched path (BatchNorm active)
    out = jax.block_until_ready(dqn_network_forward(x, packed))
    ref = _reference_forward(x, params)
    assert out.shape == (BATCH, OUTPUT_SIZE)
    assert jnp.allclose(out, ref, atol=5e-2, rtol=5e-2)

    # padded-slab path (no wrapper slice; padded lanes argmax-safe)
    out_pad = jax.block_until_ready(dqn_network_forward(x, packed, padded_output=True))
    assert out_pad.shape == (BATCH, packed["out_p"])
    assert jnp.allclose(out_pad[:, :OUTPUT_SIZE], ref, atol=5e-2, rtol=5e-2)
    assert bool(jnp.all(out_pad[:, OUTPUT_SIZE:] < -1e37))

    # single-state 1-D path (BatchNorm skipped, mirrors the PyTorch branch)
    out1 = jax.block_until_ready(dqn_network_forward(x[0], packed))
    ref1 = _reference_forward(x[0][None, :], params)[0]
    assert out1.shape == (OUTPUT_SIZE,)
    assert jnp.allclose(out1, ref1, atol=5e-2, rtol=5e-2)

    print("KERNEL_OK")
</pallas_src>

<mosaic_0001>
module attributes {stable_mosaic.version = 11 : i64} {
  func.func @_dqn_kernel(%arg0: memref<8x16xbf16, #tpu.memory_space<vmem>>, %arg1: memref<16x128xbf16, #tpu.memory_space<vmem>>, %arg2: memref<128x384xbf16, #tpu.memory_space<vmem>>, %arg3: memref<10x128xf32, #tpu.memory_space<vmem>>, %arg4: memref<8x128xf32, #tpu.memory_space<vmem>>) attributes {dimension_semantics = [], scalar_prefetch = 0 : i64, scratch_operands = 0 : i64, tpu.core_type = #tpu.core_type<tc>} {
    %c0 = arith.constant 0 : index
    %c0_0 = arith.constant 0 : index
    %0 = vector.load %arg0[%c0, %c0_0] : memref<8x16xbf16, #tpu.memory_space<vmem>>, vector<8x16xbf16>
    %c0_1 = arith.constant 0 : index
    %c0_2 = arith.constant 0 : index
    %1 = vector.load %arg1[%c0_1, %c0_2] : memref<16x128xbf16, #tpu.memory_space<vmem>>, vector<16x128xbf16>
    %c0_3 = arith.constant 0 : index
    %c0_4 = arith.constant 0 : index
    %2 = vector.load %arg3[%c0_3, %c0_4] : memref<10x128xf32, #tpu.memory_space<vmem>>, vector<1x128xf32>
    %cst = arith.constant dense<0.000000e+00> : vector<8x128xf32>
    %3 = tpu.matmul %0, %1, %cst {dimension_numbers = #tpu.dot_dimension_numbers<[1], [0], [0], [1], [0, 0, 1, 1], [], []>} : vector<8x16xbf16>, vector<16x128xbf16>, vector<8x128xf32> -> vector<8x128xf32>
    %4 = vector.broadcast %2 : vector<1x128xf32> to vector<8x128xf32>
    %5 = arith.addf %3, %4 : vector<8x128xf32>
    %c1 = arith.constant 1 : index
    %c0_5 = arith.constant 0 : index
    %6 = vector.load %arg3[%c1, %c0_5] : memref<10x128xf32, #tpu.memory_space<vmem>>, vector<1x128xf32>
    %c2 = arith.constant 2 : index
    %c0_6 = arith.constant 0 : index
    %7 = vector.load %arg3[%c2, %c0_6] : memref<10x128xf32, #tpu.memory_space<vmem>>, vector<1x128xf32>
    %cst_7 = arith.constant 0.000000e+00 : f32
    %8 = vector.broadcast %cst_7 : f32 to vector<8x128xf32>
    %9 = arith.maximumf %5, %8 : vector<8x128xf32>
    %cst_8 = arith.constant dense<0.000000e+00> : vector<128xf32>
    %10 = vector.multi_reduction <add>, %9, %cst_8 [0] : vector<8x128xf32> to vector<128xf32>
    %11 = vector.shape_cast %10 : vector<128xf32> to vector<1x128xf32>
    %cst_9 = arith.constant 8.000000e+00 : f32
    %12 = vector.broadcast %cst_9 : f32 to vector<1x128xf32>
    %13 = arith.divf %11, %12 : vector<1x128xf32>
    %14 = arith.mulf %9, %9 : vector<8x128xf32>
    %cst_10 = arith.constant dense<0.000000e+00> : vector<128xf32>
    %15 = vector.multi_reduction <add>, %14, %cst_10 [0] : vector<8x128xf32> to vector<128xf32>
    %16 = vector.shape_cast %15 : vector<128xf32> to vector<1x128xf32>
    %cst_11 = arith.constant 8.000000e+00 : f32
    %17 = vector.broadcast %cst_11 : f32 to vector<1x128xf32>
    %18 = arith.divf %16, %17 : vector<1x128xf32>
    %19 = arith.mulf %13, %13 : vector<1x128xf32>
    %20 = arith.subf %18, %19 : vector<1x128xf32>
    %cst_12 = arith.constant 0.000000e+00 : f32
    %21 = vector.broadcast %cst_12 : f32 to vector<1x128xf32>
    %22 = arith.maximumf %20, %21 : vector<1x128xf32>
    %cst_13 = arith.constant 9.99999974E-6 : f32
    %23 = vector.broadcast %cst_13 : f32 to vector<1x128xf32>
    %24 = arith.addf %22, %23 : vector<1x128xf32>
    %25 = math.rsqrt %24 : vector<1x128xf32>
    %26 = arith.mulf %6, %25 : vector<1x128xf32>
    %27 = arith.mulf %13, %26 : vector<1x128xf32>
    %28 = arith.subf %7, %27 : vector<1x128xf32>
    %29 = vector.broadcast %26 : vector<1x128xf32> to vector<8x128xf32>
    %30 = arith.mulf %9, %29 : vector<8x128xf32>
    %31 = vector.broadcast %28 : vector<1x128xf32> to vector<8x128xf32>
    %32 = arith.addf %30, %31 : vector<8x128xf32>
    %33 = arith.truncf %32 : vector<8x128xf32> to vector<8x128xbf16>
    %c0_14 = arith.constant 0 : index
    %c0_15 = arith.constant 0 : index
    %34 = vector.load %arg2[%c0_14, %c0_15] : memref<128x384xbf16, #tpu.memory_space<vmem>>, vector<128x128xbf16>
    %c3 = arith.constant 3 : index
    %c0_16 = arith.constant 0 : index
    %35 = vector.load %arg3[%c3, %c0_16] : memref<10x128xf32, #tpu.memory_space<vmem>>, vector<1x128xf32>
    %cst_17 = arith.constant dense<0.000000e+00> : vector<8x128xf32>
    %36 = tpu.matmul %33, %34, %cst_17 {dimension_numbers = #tpu.dot_dimension_numbers<[1], [0], [0], [1], [0, 0, 1, 1], [], []>} : vector<8x128xbf16>, vector<128x128xbf16>, vector<8x128xf32> -> vector<8x128xf32>
    %37 = vector.broadcast %35 : vector<1x128xf32> to vector<8x128xf32>
    %38 = arith.addf %36, %37 : vector<8x128xf32>
    %c4 = arith.constant 4 : index
    %c0_18 = arith.constant 0 : index
    %39 = vector.load %arg3[%c4, %c0_18] : memref<10x128xf32, #tpu.memory_space<vmem>>, vector<1x128xf32>
    %c5 = arith.constant 5 : index
    %c0_19 = arith.constant 0 : index
    %40 = vector.load %arg3[%c5, %c0_19] : memref<10x128xf32, #tpu.memory_space<vmem>>, vector<1x128xf32>
    %cst_20 = arith.constant 0.000000e+00 : f32
    %41 = vector.broadcast %cst_20 : f32 to vector<8x128xf32>
    %42 = arith.maximumf %38, %41 : vector<8x128xf32>
    %cst_21 = arith.constant dense<0.000000e+00> : vector<128xf32>
    %43 = vector.multi_reduction <add>, %42, %cst_21 [0] : vector<8x128xf32> to vector<128xf32>
    %44 = vector.shape_cast %43 : vector<128xf32> to vector<1x128xf32>
    %cst_22 = arith.constant 8.000000e+00 : f32
    %45 = vector.broadcast %cst_22 : f32 to vector<1x128xf32>
    %46 = arith.divf %44, %45 : vector<1x128xf32>
    %47 = arith.mulf %42, %42 : vector<8x128xf32>
    %cst_23 = arith.constant dense<0.000000e+00> : vector<128xf32>
    %48 = vector.multi_reduction <add>, %47, %cst_23 [0] : vector<8x128xf32> to vector<128xf32>
    %49 = vector.shape_cast %48 : vector<128xf32> to vector<1x128xf32>
    %cst_24 = arith.constant 8.000000e+00 : f32
    %50 = vector.broadcast %cst_24 : f32 to vector<1x128xf32>
    %51 = arith.divf %49, %50 : vector<1x128xf32>
    %52 = arith.mulf %46, %46 : vector<1x128xf32>
    %53 = arith.subf %51, %52 : vector<1x128xf32>
    %cst_25 = arith.constant 0.000000e+00 : f32
    %54 = vector.broadcast %cst_25 : f32 to vector<1x128xf32>
    %55 = arith.maximumf %53, %54 : vector<1x128xf32>
    %cst_26 = arith.constant 9.99999974E-6 : f32
    %56 = vector.broadcast %cst_26 : f32 to vector<1x128xf32>
    %57 = arith.addf %55, %56 : vector<1x128xf32>
    %58 = math.rsqrt %57 : vector<1x128xf32>
    %59 = arith.mulf %39, %58 : vector<1x128xf32>
    %60 = arith.mulf %46, %59 : vector<1x128xf32>
    %61 = arith.subf %40, %60 : vector<1x128xf32>
    %62 = vector.broadcast %59 : vector<1x128xf32> to vector<8x128xf32>
    %63 = arith.mulf %42, %62 : vector<8x128xf32>
    %64 = vector.broadcast %61 : vector<1x128xf32> to vector<8x128xf32>
    %65 = arith.addf %63, %64 : vector<8x128xf32>
    %66 = arith.truncf %65 : vector<8x128xf32> to vector<8x128xbf16>
    %c0_27 = arith.constant 0 : index
    %c128 = arith.constant 128 : index
    %67 = vector.load %arg2[%c0_27, %c128] : memref<128x384xbf16, #tpu.memory_space<vmem>>, vector<128x128xbf16>
    %c6 = arith.constant 6 : index
    %c0_28 = arith.constant 0 : index
    %68 = vector.load %arg3[%c6, %c0_28] : memref<10x128xf32, #tpu.memory_space<vmem>>, vector<1x128xf32>
    %cst_29 = arith.constant dense<0.000000e+00> : vector<8x128xf32>
    %69 = tpu.matmul %66, %67, %cst_29 {dimension_numbers = #tpu.dot_dimension_numbers<[1], [0], [0], [1], [0, 0, 1, 1], [], []>} : vector<8x128xbf16>, vector<128x128xbf16>, vector<8x128xf32> -> vector<8x128xf32>
    %70 = vector.broadcast %68 : vector<1x128xf32> to vector<8x128xf32>
    %71 = arith.addf %69, %70 : vector<8x128xf32>
    %c7 = arith.constant 7 : index
    %c0_30 = arith.constant 0 : index
    %72 = vector.load %arg3[%c7, %c0_30] : memref<10x128xf32, #tpu.memory_space<vmem>>, vector<1x128xf32>
    %c8 = arith.constant 8 : index
    %c0_31 = arith.constant 0 : index
    %73 = vector.load %arg3[%c8, %c0_31] : memref<10x128xf32, #tpu.memory_space<vmem>>, vector<1x128xf32>
    %cst_32 = arith.constant 0.000000e+00 : f32
    %74 = vector.broadcast %cst_32 : f32 to vector<8x128xf32>
    %75 = arith.maximumf %71, %74 : vector<8x128xf32>
    %cst_33 = arith.constant dense<0.000000e+00> : vector<128xf32>
    %76 = vector.multi_reduction <add>, %75, %cst_33 [0] : vector<8x128xf32> to vector<128xf32>
    %77 = vector.shape_cast %76 : vector<128xf32> to vector<1x128xf32>
    %cst_34 = arith.constant 8.000000e+00 : f32
    %78 = vector.broadcast %cst_34 : f32 to vector<1x128xf32>
    %79 = arith.divf %77, %78 : vector<1x128xf32>
    %80 = arith.mulf %75, %75 : vector<8x128xf32>
    %cst_35 = arith.constant dense<0.000000e+00> : vector<128xf32>
    %81 = vector.multi_reduction <add>, %80, %cst_35 [0] : vector<8x128xf32> to vector<128xf32>
    %82 = vector.shape_cast %81 : vector<128xf32> to vector<1x128xf32>
    %cst_36 = arith.constant 8.000000e+00 : f32
    %83 = vector.broadcast %cst_36 : f32 to vector<1x128xf32>
    %84 = arith.divf %82, %83 : vector<1x128xf32>
    %85 = arith.mulf %79, %79 : vector<1x128xf32>
    %86 = arith.subf %84, %85 : vector<1x128xf32>
    %cst_37 = arith.constant 0.000000e+00 : f32
    %87 = vector.broadcast %cst_37 : f32 to vector<1x128xf32>
    %88 = arith.maximumf %86, %87 : vector<1x128xf32>
    %cst_38 = arith.constant 9.99999974E-6 : f32
    %89 = vector.broadcast %cst_38 : f32 to vector<1x128xf32>
    %90 = arith.addf %88, %89 : vector<1x128xf32>
    %91 = math.rsqrt %90 : vector<1x128xf32>
    %92 = arith.mulf %72, %91 : vector<1x128xf32>
    %93 = arith.mulf %79, %92 : vector<1x128xf32>
    %94 = arith.subf %73, %93 : vector<1x128xf32>
    %95 = vector.broadcast %92 : vector<1x128xf32> to vector<8x128xf32>
    %96 = arith.mulf %75, %95 : vector<8x128xf32>
    %97 = vector.broadcast %94 : vector<1x128xf32> to vector<8x128xf32>
    %98 = arith.addf %96, %97 : vector<8x128xf32>
    %99 = arith.truncf %98 : vector<8x128xf32> to vector<8x128xbf16>
    %c0_39 = arith.constant 0 : index
    %c256 = arith.constant 256 : index
    %100 = vector.load %arg2[%c0_39, %c256] : memref<128x384xbf16, #tpu.memory_space<vmem>>, vector<128x128xbf16>
    %c9 = arith.constant 9 : index
    %c0_40 = arith.constant 0 : index
    %101 = vector.load %arg3[%c9, %c0_40] : memref<10x128xf32, #tpu.memory_space<vmem>>, vector<1x128xf32>
    %cst_41 = arith.constant dense<0.000000e+00> : vector<8x128xf32>
    %102 = tpu.matmul %99, %100, %cst_41 {dimension_numbers = #tpu.dot_dimension_numbers<[1], [0], [0], [1], [0, 0, 1, 1], [], []>} : vector<8x128xbf16>, vector<128x128xbf16>, vector<8x128xf32> -> vector<8x128xf32>
    %103 = vector.broadcast %101 : vector<1x128xf32> to vector<8x128xf32>
    %104 = arith.addf %102, %103 : vector<8x128xf32>
    %105 = tpu.iota {dimensions = array<i32: 1>} : vector<8x128xi32>
    %c4_i32 = arith.constant 4 : i32
    %106 = vector.broadcast %c4_i32 : i32 to vector<8x128xi32>
    %107 = arith.cmpi slt, %105, %106 : vector<8x128xi32>
    %cst_42 = arith.constant -3.40282347E+38 : f32
    %108 = vector.broadcast %cst_42 : f32 to vector<8x128xf32>
    %109 = arith.select %107, %104, %108 : vector<8x128xi1>, vector<8x128xf32>
    %c0_43 = arith.constant 0 : index
    %c0_44 = arith.constant 0 : index
    %110 = vector.load %arg4[%c0_43, %c0_44] : memref<8x128xf32, #tpu.memory_space<vmem>>, vector<8x128xf32>
    tpu.vector_store %arg4[%c0_43, %c0_44], %109 {strides = array<i32>} : memref<8x128xf32, #tpu.memory_space<vmem>>, vector<8x128xf32>,
    return
  }
}

</mosaic_0001>

<llo_original>
// kernel: tpu_custom_call.1
$region0: #{tpu_custom_call.1}
  #allocation0 [shape = 'u32[]', space=smem, size = 0x4, offset = 0x4, fixed_abs, tag = 'smem constant byte address 0x4 - core index']
  #allocation1 [shape = 'u32[144,128]{1,0:T(1,128)}', space=vmem, size = 0x12000, scoped, tag = 'internal scratch']
  %s0 = inlined_call_operand.hbm [shape: bf16[8,16], index: 0, kind: input, shape index: {}]
  %s1 = inlined_call_operand.hbm [shape: bf16[16,128], index: 1, kind: input, shape index: {}]
  %s2 = inlined_call_operand.hbm [shape: bf16[128,384], index: 2, kind: input, shape index: {}]
  %s3 = inlined_call_operand.hbm [shape: f32[10,128], index: 3, kind: input, shape index: {}]
  %s4 = inlined_call_operand.hbm [shape: f32[8,128], index: 4, kind: output, shape index: {}]
  %s5 = sld [smem:[#allocation0]]
  $region42: #{tpu_custom_call.1} parent=0
    _
  %s7 = ssub.s32 1, %s5
  %s8 = scalar_select 0, %s7, %s5
  $region1: #{tpu_custom_call.1} parent=0
    #allocation2 [shape = 'u8[2048]{0}', space=vmem, size = 0x800, scoped, tag = 'input window, operand 0, single buffered']
    #allocation3 [shape = 's32[1]{0}', space=sflag, size = 0x4, scoped, tag = 'scoped memory for tpu_custom_call.1']
    #allocation4 [shape = 's32[1]{0}', space=sflag, size = 0x4, scoped, tag = 'scoped memory for tpu_custom_call.1']
    #allocation5 [shape = 'u8[4096]{0}', space=vmem, size = 0x1000, scoped, tag = 'input window, operand 1, single buffered']
    #allocation6 [shape = 's32[1]{0}', space=sflag, size = 0x4, scoped, tag = 'scoped memory for tpu_custom_call.1']
    #allocation7 [shape = 'u8[98304]{0}', space=vmem, size = 0x18000, scoped, tag = 'input window, operand 2, single buffered']
    #allocation8 [shape = 'u8[8192]{0}', space=vmem, size = 0x2000, scoped, tag = 'input window, operand 3, single buffered']
    #allocation9 [shape = 's32[1]{0}', space=sflag, size = 0x4, scoped, tag = 'scoped memory for tpu_custom_call.1']
    #allocation10 [shape = 'u8[4096]{0}', space=vmem, size = 0x1000, scoped, tag = 'output window, operand 0, single buffered']
    %9 = vsyncpa [#allocation3], 0
    %10 = vsyncpa [#allocation6], 0
    %11 = vsyncpa [#allocation9], 0
    %12 = vsyncpa [#allocation4], 0
    // Predicated region
    $region2: #{tpu_custom_call.1} parent=1 // pred_check
      _
    $region3: #{tpu_custom_call.1} parent=1 // pred_check_branch
      %14 = sbr.rel (0) target = $region5
    $region4: #{tpu_custom_call.1} parent=1 // pred_region
      %s16 = ssub.s32 64, 64
      %17 = vsyncadd [#allocation3], %s16
      %s19 = sshll.u32 [#allocation2], 4
      %s20 = int_to_ptr.vmem [resolvable:$true] %s19
      %22 = dma.hbm_to_vmem [thread:$0]  %s0, 64, %s20, [#allocation3]
    $region5: #{tpu_custom_call.1} parent=1 // pred_fallthru
      _
    // Predicated region
    $region6: #{tpu_custom_call.1} parent=1 // pred_check
      _
    $region7: #{tpu_custom_call.1} parent=1 // pred_check_branch
      %24 = sbr.rel (0) target = $region9
    $region8: #{tpu_custom_call.1} parent=1 // pred_region
      %s26 = ssub.s32 128, 128
      %27 = vsyncadd [#allocation6], %s26
      %s28 = sshll.u32 [#allocation5], 4
      %s29 = int_to_ptr.vmem [resolvable:$true] %s28
      %34 = dma.hbm_to_vmem [thread:$0]  %s1, 128, %s29, [#allocation6], 64, 64, 4
    $region9: #{tpu_custom_call.1} parent=1 // pred_fallthru
      _
    // Predicated region
    $region10: #{tpu_custom_call.1} parent=1 // pred_check
      _
    $region11: #{tpu_custom_call.1} parent=1 // pred_check_branch
      %36 = sbr.rel (0) target = $region13
    $region12: #{tpu_custom_call.1} parent=1 // pred_region
      %s38 = ssub.s32 3072, 3072
      %39 = vsyncadd [#allocation6], %s38
      %s40 = sshll.u32 [#allocation7], 4
      %s41 = int_to_ptr.vmem [resolvable:$true] %s40
      %46 = dma.hbm_to_vmem [thread:$0]  %s2, 3072, %s41, [#allocation6], 192, 192, 12
    $region13: #{tpu_custom_call.1} parent=1 // pred_fallthru
      _
    // Predicated region
    $region14: #{tpu_custom_call.1} parent=1 // pred_check
      _
    $region15: #{tpu_custom_call.1} parent=1 // pred_check_branch
      %48 = sbr.rel (0) target = $region17
    $region16: #{tpu_custom_call.1} parent=1 // pred_region
      %s50 = ssub.s32 256, 256
      %51 = vsyncadd [#allocation9], %s50
      %s52 = sshll.u32 [#allocation8], 4
      %s53 = int_to_ptr.vmem [resolvable:$true] %s52
      %58 = dma.hbm_to_vmem [thread:$0]  %s3, 256, %s53, [#allocation9], 128, 128, 8
    $region17: #{tpu_custom_call.1} parent=1 // pred_fallthru
      _
    // Predicated region
    $region18: #{tpu_custom_call.1} parent=1 // pred_check
      _
    $region19: #{tpu_custom_call.1} parent=1 // pred_check_branch
      %60 = sbr.rel (0) target = $region21
    $region20: #{tpu_custom_call.1} parent=1 // pred_region
      %61 = dma.done [#allocation3], 64
    $region21: #{tpu_custom_call.1} parent=1 // pred_fallthru
      _
    // Predicated region
    $region22: #{tpu_custom_call.1} parent=1 // pred_check
      _
    $region23: #{tpu_custom_call.1} parent=1 // pred_check_branch
      %63 = sbr.rel (0) target = $region25
    $region24: #{tpu_custom_call.1} parent=1 // pred_region
      %64 = dma.done [#allocation6], 128
    $region25: #{tpu_custom_call.1} parent=1 // pred_fallthru
      _
    // Predicated region
    $region26: #{tpu_custom_call.1} parent=1 // pred_check
      _
    $region27: #{tpu_custom_call.1} parent=1 // pred_check_branch
      %66 = sbr.rel (0) target = $region29
    $region28: #{tpu_custom_call.1} parent=1 // pred_region
      %67 = dma.done [#allocation6], 3072
    $region29: #{tpu_custom_call.1} parent=1 // pred_fallthru
      _
    // Predicated region
    $region30: #{tpu_custom_call.1} parent=1 // pred_check
      _
    $region31: #{tpu_custom_call.1} parent=1 // pred_check_branch
      %69 = sbr.rel (0) target = $region33
    $region32: #{tpu_custom_call.1} parent=1 // pred_region
      %70 = dma.done [#allocation9], 256
    $region33: #{tpu_custom_call.1} parent=1 // pred_fallthru
      _
    %v72 = vld [vmem:[#allocation2] sm:$0xf]
    %v73 = vld [vmem:[#allocation5] sm:$0xf]
    %v74 = vld [vmem:[#allocation5 + $0x4] sm:$0xf]
    %v75 = vld [vmem:[#allocation8] sm:$0x1]
    %v76 = vlaneseq
    %v77 = vshrl.u32 %v76, 7
    %v78 = vsub.s32 0, %v77
    %v79 = vrot.slane %v75, %v78
    %v82 = vunpack.c.l.b16 %v73
    %v83 = vunpack.c.l.b16 %v74
    %v84 = vpack.c.b16 %v83, %v82
    %vm86 = vcmask 130048
    %v88 = vsel %vm86, %v72, 0
    %90 = vmatprep.subr.bf16.mxu0 0
    %91 = vmatpush1.bf16.msra.mxu0 %v84
    %92 = vmatprep.subr.bf16.mxu0 0
    %93 = vmatpush1.bf16.msra.mxu0 0
    %94 = vmatprep.subr.bf16.mxu0 0
    %95 = vmatpush1.bf16.msra.mxu0 0
    %96 = vmatprep.subr.bf16.mxu0 0
    %97 = vmatpush1.bf16.msra.mxu0 0
    %98 = vmatprep.subr.bf16.mxu0 0
    %99 = vmatpush1.bf16.msra.mxu0 0
    %100 = vmatprep.subr.bf16.mxu0 0
    %101 = vmatpush1.bf16.msra.mxu0 0
    %102 = vmatprep.subr.bf16.mxu0 0
    %103 = vmatpush1.bf16.msra.mxu0 0
    %104 = vmatprep.subr.bf16.mxu0 0
    %105 = vmatpush1.bf16.msra.mxu0 0
    %106 = vmatprep.subr.bf16.mxu0 0
    %107 = vmatpush1.bf16.msra.mxu0 0
    %108 = vmatprep.subr.bf16.mxu0 0
    %109 = vmatpush1.bf16.msra.mxu0 0
    %110 = vmatprep.subr.bf16.mxu0 0
    %111 = vmatpush1.bf16.msra.mxu0 0
    %112 = vmatprep.subr.bf16.mxu0 0
    %113 = vmatpush1.bf16.msra.mxu0 0
    %114 = vmatprep.subr.bf16.mxu0 0
    %115 = vmatpush1.bf16.msra.mxu0 0
    %116 = vmatprep.subr.bf16.mxu0 0
    %117 = vmatpush1.bf16.msra.mxu0 0
    %118 = vmatprep.subr.bf16.mxu0 0
    %119 = vmatpush1.bf16.msra.mxu0 0
    %120 = vmatprep.subr.bf16.mxu0 0
    %121 = vmatpush1.bf16.msra.mxu0 0
    %122 = vmatprep.mubr.bf16.mxu0 0
    %123 = vmatmul.mubr.bf16.gmra.mrb[0].mxu0 %v88
    %v124 = vpop.f32.mrb[0].mxu0
    %v125 = vadd.f32 %v79, %v124
    %v126 = vpop.f32.mrb[0].mxu0
    %v127 = vpop.f32.mrb[0].mxu0
    %v128 = vpop.f32.mrb[0].mxu0
    %129 = vdwg.mxu0
    %v130 = vld [vmem:[#allocation8 + $0x1] sm:$0x1]
    %v131 = vld [vmem:[#allocation8 + $0x2] sm:$0x1]
    %v132 = vmax.f32 %v125, 0.0
    %v133 = vrot.slane %v132, 4
    %v134 = vadd.f32 %v132, %v133
    %v135 = vrot.slane %v134, 2
    %v136 = vadd.f32 %v134, %v135
    %v137 = vrot.slane %v136, 1
    %v138 = vadd.f32 %v136, %v137
    %v139 = vrcp.pop 8.0
    %v140 = vmul.f32 %v138, %v139
    %v141 = vmul.f32 %v132, %v132
    %v142 = vrot.slane %v141, 4
    %v143 = vadd.f32 %v141, %v142
    %v144 = vrot.slane %v143, 2
    %v145 = vadd.f32 %v143, %v144
    %v146 = vrot.slane %v145, 1
    %v147 = vadd.f32 %v145, %v146
    %v148 = vmul.f32 %v147, %v139
    %v149 = vmul.f32 %v140, %v140
    %v150 = vsub.f32 %v148, %v149
    %v151 = vmax.f32 %v150, 0.0
    %v152 = vadd.f32 %v151, 1e-05
    %v153 = vrsqrt.pop %v152
    %v154 = vmul.f32 %v130, %v153
    %v155 = vmul.f32 %v140, %v154
    %v156 = vsub.f32 %v131, %v155
    %v157 = vlaneseq
    %v158 = vshrl.u32 %v157, 7
    %v159 = vsub.s32 0, %v158
    %v160 = vrot.slane %v154, %v159
    %v161 = vmul.f32 %v132, %v160
    %v162 = vlaneseq
    %v163 = vshrl.u32 %v162, 7
    %v164 = vsub.s32 0, %v163
    %v165 = vrot.slane %v156, %v164
    %v166 = vadd.f32 %v161, %v165
    %v167 = vpack.c.bf16 %v166, %v166
    %v168 = vld [vmem:[#allocation7] sm:$0xf]
    %v169 = vld [vmem:[#allocation7 + $0xc] sm:$0xf]
    %v170 = vld [vmem:[#allocation7 + $0x18] sm:$0xf]
    %v171 = vld [vmem:[#allocation7 + $0x24] sm:$0xf]
    %v172 = vld [vmem:[#allocation7 + $0x30] sm:$0xf]
    %v173 = vld [vmem:[#allocation7 + $0x3c] sm:$0xf]
    %v174 = vld [vmem:[#allocation7 + $0x48] sm:$0xf]
    %v175 = vld [vmem:[#allocation7 + $0x54] sm:$0xf]
    %v176 = vld [vmem:[#allocation7 + $0x60] sm:$0xf]
    %v177 = vld [vmem:[#allocation7 + $0x6c] sm:$0xf]
    %v178 = vld [vmem:[#allocation7 + $0x78] sm:$0xf]
    %v179 = vld [vmem:[#allocation7 + $0x84] sm:$0xf]
    %v180 = vld [vmem:[#allocation7 + $0x90] sm:$0xf]
    %v181 = vld [vmem:[#allocation7 + $0x9c] sm:$0xf]
    %v182 = vld [vmem:[#allocation7 + $0xa8] sm:$0xf]
    %v183 = vld [vmem:[#allocation7 + $0xb4] sm:$0xf]
    %v184 = vld [vmem:[#allocation8 + $0x3] sm:$0x1]
    %v185 = vlaneseq
    %v186 = vshrl.u32 %v185, 7
    %v187 = vsub.s32 0, %v186
    %v188 = vrot.slane %v184, %v187
    %v205 = vunpack.c.l.b16 %v168
    %v206 = vunpack.c.l.b16 %v169
    %v207 = vunpack.c.l.b16 %v170
    %v208 = vunpack.c.l.b16 %v171
    %v209 = vunpack.c.l.b16 %v172
    %v210 = vunpack.c.l.b16 %v173
    %v211 = vunpack.c.l.b16 %v174
    %v212 = vunpack.c.l.b16 %v175
    %v213 = vunpack.c.l.b16 %v176
    %v214 = vunpack.c.l.b16 %v177
    %v215 = vunpack.c.l.b16 %v178
    %v216 = vunpack.c.l.b16 %v179
    %v217 = vunpack.c.l.b16 %v180
    %v218 = vunpack.c.l.b16 %v181
    %v219 = vunpack.c.l.b16 %v182
    %v220 = vunpack.c.l.b16 %v183
    %v221 = vpack.c.b16 %v206, %v205
    %v222 = vpack.c.b16 %v208, %v207
    %v223 = vpack.c.b16 %v210, %v209
    %v224 = vpack.c.b16 %v212, %v211
    %v225 = vpack.c.b16 %v214, %v213
    %v226 = vpack.c.b16 %v216, %v215
    %v227 = vpack.c.b16 %v218, %v217
    %v228 = vpack.c.b16 %v220, %v219
    %237 = vmatprep.subr.bf16.mxu0 0
    %238 = vmatpush1.bf16.msra.mxu0 %v221
    %239 = vmatprep.subr.bf16.mxu0 0
    %240 = vmatpush1.bf16.msra.mxu0 %v222
    %241 = vmatprep.subr.bf16.mxu0 0
    %242 = vmatpush1.bf16.msra.mxu0 %v223
    %243 = vmatprep.subr.bf16.mxu0 0
    %244 = vmatpush1.bf16.msra.mxu0 %v224
    %245 = vmatprep.subr.bf16.mxu0 0
    %246 = vmatpush1.bf16.msra.mxu0 %v225
    %247 = vmatprep.subr.bf16.mxu0 0
    %248 = vmatpush1.bf16.msra.mxu0 %v226
    %249 = vmatprep.subr.bf16.mxu0 0
    %250 = vmatpush1.bf16.msra.mxu0 %v227
    %251 = vmatprep.subr.bf16.mxu0 0
    %252 = vmatpush1.bf16.msra.mxu0 %v228
    %253 = vmatprep.subr.bf16.mxu0 0
    %254 = vmatpush1.bf16.msra.mxu0 0
    %255 = vmatprep.subr.bf16.mxu0 0
    %256 = vmatpush1.bf16.msra.mxu0 0
    %257 = vmatprep.subr.bf16.mxu0 0
    %258 = vmatpush1.bf16.msra.mxu0 0
    %259 = vmatprep.subr.bf16.mxu0 0
    %260 = vmatpush1.bf16.msra.mxu0 0
    %261 = vmatprep.subr.bf16.mxu0 0
    %262 = vmatpush1.bf16.msra.mxu0 0
    %263 = vmatprep.subr.bf16.mxu0 0
    %264 = vmatpush1.bf16.msra.mxu0 0
    %265 = vmatprep.subr.bf16.mxu0 0
    %266 = vmatpush1.bf16.msra.mxu0 0
    %267 = vmatprep.subr.bf16.mxu0 0
    %268 = vmatpush1.bf16.msra.mxu0 0
    %269 = vmatprep.mubr.bf16.mxu0 0
    %270 = vmatmul.mubr.bf16.gmra.mrb[0].mxu0 %v167
    %v271 = vpop.f32.mrb[0].mxu0
    %v272 = vadd.f32 %v188, %v271
    %v273 = vpop.f32.mrb[0].mxu0
    %v274 = vpop.f32.mrb[0].mxu0
    %v275 = vpop.f32.mrb[0].mxu0
    %276 = vdwg.mxu0
    %v277 = vld [vmem:[#allocation8 + $0x4] sm:$0x1]
    %v278 = vld [vmem:[#allocation8 + $0x5] sm:$0x1]
    %v279 = vmax.f32 %v272, 0.0
    %v280 = vrot.slane %v279, 4
    %v281 = vadd.f32 %v279, %v280
    %v282 = vrot.slane %v281, 2
    %v283 = vadd.f32 %v281, %v282
    %v284 = vrot.slane %v283, 1
    %v285 = vadd.f32 %v283, %v284
    %v286 = vmul.f32 %v285, %v139
    %v287 = vmul.f32 %v279, %v279
    %v288 = vrot.slane %v287, 4
    %v289 = vadd.f32 %v287, %v288
    %v290 = vrot.slane %v289, 2
    %v291 = vadd.f32 %v289, %v290
    %v292 = vrot.slane %v291, 1
    %v293 = vadd.f32 %v291, %v292
    %v294 = vmul.f32 %v293, %v139
    %v295 = vmul.f32 %v286, %v286
    %v296 = vsub.f32 %v294, %v295
    %v297 = vmax.f32 %v296, 0.0
    %v298 = vadd.f32 %v297, 1e-05
    %v299 = vrsqrt.pop %v298
    %v300 = vmul.f32 %v277, %v299
    %v301 = vmul.f32 %v286, %v300
    %v302 = vsub.f32 %v278, %v301
    %v303 = vlaneseq
    %v304 = vshrl.u32 %v303, 7
    %v305 = vsub.s32 0, %v304
    %v306 = vrot.slane %v300, %v305
    %v307 = vmul.f32 %v279, %v306
    %v308 = vlaneseq
    %v309 = vshrl.u32 %v308, 7
    %v310 = vsub.s32 0, %v309
    %v311 = vrot.slane %v302, %v310
    %v312 = vadd.f32 %v307, %v311
    %v313 = vpack.c.bf16 %v312, %v312
    %v314 = vld [vmem:[#allocation7 + $0x4] sm:$0xf]
    %v315 = vld [vmem:[#allocation7 + $0x10] sm:$0xf]
    %v316 = vld [vmem:[#allocation7 + $0x1c] sm:$0xf]
    %v317 = vld [vmem:[#allocation7 + $0x28] sm:$0xf]
    %v318 = vld [vmem:[#allocation7 + $0x34] sm:$0xf]
    %v319 = vld [vmem:[#allocation7 + $0x40] sm:$0xf]
    %v320 = vld [vmem:[#allocation7 + $0x4c] sm:$0xf]
    %v321 = vld [vmem:[#allocation7 + $0x58] sm:$0xf]
    %v322 = vld [vmem:[#allocation7 + $0x64] sm:$0xf]
    %v323 = vld [vmem:[#allocation7 + $0x70] sm:$0xf]
    %v324 = vld [vmem:[#allocation7 + $0x7c] sm:$0xf]
    %v325 = vld [vmem:[#allocation7 + $0x88] sm:$0xf]
    %v326 = vld [vmem:[#allocation7 + $0x94] sm:$0xf]
    %v327 = vld [vmem:[#allocation7 + $0xa0] sm:$0xf]
    %v328 = vld [vmem:[#allocation7 + $0xac] sm:$0xf]
    %v329 = vld [vmem:[#allocation7 + $0xb8] sm:$0xf]
    %v330 = vld [vmem:[#allocation8 + $0x6] sm:$0x1]
    %v331 = vlaneseq
    %v332 = vshrl.u32 %v331, 7
    %v333 = vsub.s32 0, %v332
    %v334 = vrot.slane %v330, %v333
    %v351 = vunpack.c.l.b16 %v314
    %v352 = vunpack.c.l.b16 %v315
    %v353 = vunpack.c.l.b16 %v316
    %v354 = vunpack.c.l.b16 %v317
    %v355 = vunpack.c.l.b16 %v318
    %v356 = vunpack.c.l.b16 %v319
    %v357 = vunpack.c.l.b16 %v320
    %v358 = vunpack.c.l.b16 %v321
    %v359 = vunpack.c.l.b16 %v322
    %v360 = vunpack.c.l.b16 %v323
    %v361 = vunpack.c.l.b16 %v324
    %v362 = vunpack.c.l.b16 %v325
    %v363 = vunpack.c.l.b16 %v326
    %v364 = vunpack.c.l.b16 %v327
    %v365 = vunpack.c.l.b16 %v328
    %v366 = vunpack.c.l.b16 %v329
    %v367 = vpack.c.b16 %v352, %v351
    %v368 = vpack.c.b16 %v354, %v353
    %v369 = vpack.c.b16 %v356, %v355
    %v370 = vpack.c.b16 %v358, %v357
    %v371 = vpack.c.b16 %v360, %v359
    %v372 = vpack.c.b16 %v362, %v361
    %v373 = vpack.c.b16 %v364, %v363
    %v374 = vpack.c.b16 %v366, %v365
    %383 = vmatprep.subr.bf16.mxu0 0
    %384 = vmatpush1.bf16.msra.mxu0 %v367
    %385 = vmatprep.subr.bf16.mxu0 0
    %386 = vmatpush1.bf16.msra.mxu0 %v368
    %387 = vmatprep.subr.bf16.mxu0 0
    %388 = vmatpush1.bf16.msra.mxu0 %v369
    %389 = vmatprep.subr.bf16.mxu0 0
    %390 = vmatpush1.bf16.msra.mxu0 %v370
    %391 = vmatprep.subr.bf16.mxu0 0
    %392 = vmatpush1.bf16.msra.mxu0 %v371
    %393 = vmatprep.subr.bf16.mxu0 0
    %394 = vmatpush1.bf16.msra.mxu0 %v372
    %395 = vmatprep.subr.bf16.mxu0 0
    %396 = vmatpush1.bf16.msra.mxu0 %v373
    %397 = vmatprep.subr.bf16.mxu0 0
    %398 = vmatpush1.bf16.msra.mxu0 %v374
    %399 = vmatprep.subr.bf16.mxu0 0
    %400 = vmatpush1.bf16.msra.mxu0 0
    %401 = vmatprep.subr.bf16.mxu0 0
    %402 = vmatpush1.bf16.msra.mxu0 0
    %403 = vmatprep.subr.bf16.mxu0 0
    %404 = vmatpush1.bf16.msra.mxu0 0
    %405 = vmatprep.subr.bf16.mxu0 0
    %406 = vmatpush1.bf16.msra.mxu0 0
    %407 = vmatprep.subr.bf16.mxu0 0
    %408 = vmatpush1.bf16.msra.mxu0 0
    %409 = vmatprep.subr.bf16.mxu0 0
    %410 = vmatpush1.bf16.msra.mxu0 0
    %411 = vmatprep.subr.bf16.mxu0 0
    %412 = vmatpush1.bf16.msra.mxu0 0
    %413 = vmatprep.subr.bf16.mxu0 0
    %414 = vmatpush1.bf16.msra.mxu0 0
    %415 = vmatprep.mubr.bf16.mxu0 0
    %416 = vmatmul.mubr.bf16.gmra.mrb[0].mxu0 %v313
    %v417 = vpop.f32.mrb[0].mxu0
    %v418 = vadd.f32 %v334, %v417
    %v419 = vpop.f32.mrb[0].mxu0
    %v420 = vpop.f32.mrb[0].mxu0
    %v421 = vpop.f32.mrb[0].mxu0
    %422 = vdwg.mxu0
    %v423 = vld [vmem:[#allocation8 + $0x7] sm:$0x1]
    %v424 = vld [vmem:[#allocation8 + $0x8] sm:$0x1]
    %v425 = vmax.f32 %v418, 0.0
    %v426 = vrot.slane %v425, 4
    %v427 = vadd.f32 %v425, %v426
    %v428 = vrot.slane %v427, 2
    %v429 = vadd.f32 %v427, %v428
    %v430 = vrot.slane %v429, 1
    %v431 = vadd.f32 %v429, %v430
    %v432 = vmul.f32 %v431, %v139
    %v433 = vmul.f32 %v425, %v425
    %v434 = vrot.slane %v433, 4
    %v435 = vadd.f32 %v433, %v434
    %v436 = vrot.slane %v435, 2
    %v437 = vadd.f32 %v435, %v436
    %v438 = vrot.slane %v437, 1
    %v439 = vadd.f32 %v437, %v438
    %v440 = vmul.f32 %v439, %v139
    %v441 = vmul.f32 %v432, %v432
    %v442 = vsub.f32 %v440, %v441
    %v443 = vmax.f32 %v442, 0.0
    %v444 = vadd.f32 %v443, 1e-05
    %v445 = vrsqrt.pop %v444
    %v446 = vmul.f32 %v423, %v445
    %v447 = vmul.f32 %v432, %v446
    %v448 = vsub.f32 %v424, %v447
    %v449 = vlaneseq
    %v450 = vshrl.u32 %v449, 7
    %v451 = vsub.s32 0, %v450
    %v452 = vrot.slane %v446, %v451
    %v453 = vmul.f32 %v425, %v452
    %v454 = vlaneseq
    %v455 = vshrl.u32 %v454, 7
    %v456 = vsub.s32 0, %v455
    %v457 = vrot.slane %v448, %v456
    %v458 = vadd.f32 %v453, %v457
    %v459 = vpack.c.bf16 %v458, %v458
    %v460 = vld [vmem:[#allocation7 + $0x8] sm:$0xf]
    %v461 = vld [vmem:[#allocation7 + $0x14] sm:$0xf]
    %v462 = vld [vmem:[#allocation7 + $0x20] sm:$0xf]
    %v463 = vld [vmem:[#allocation7 + $0x2c] sm:$0xf]
    %v464 = vld [vmem:[#allocation7 + $0x38] sm:$0xf]
    %v465 = vld [vmem:[#allocation7 + $0x44] sm:$0xf]
    %v466 = vld [vmem:[#allocation7 + $0x50] sm:$0xf]
    %v467 = vld [vmem:[#allocation7 + $0x5c] sm:$0xf]
    %v468 = vld [vmem:[#allocation7 + $0x68] sm:$0xf]
    %v469 = vld [vmem:[#allocation7 + $0x74] sm:$0xf]
    %v470 = vld [vmem:[#allocation7 + $0x80] sm:$0xf]
    %v471 = vld [vmem:[#allocation7 + $0x8c] sm:$0xf]
    %v472 = vld [vmem:[#allocation7 + $0x98] sm:$0xf]
    %v473 = vld [vmem:[#allocation7 + $0xa4] sm:$0xf]
    %v474 = vld [vmem:[#allocation7 + $0xb0] sm:$0xf]
    %v475 = vld [vmem:[#allocation7 + $0xbc] sm:$0xf]
    %v476 = vld [vmem:[#allocation8 + $0x9] sm:$0x1]
    %v477 = vlaneseq
    %v478 = vshrl.u32 %v477, 7
    %v479 = vsub.s32 0, %v478
    %v480 = vrot.slane %v476, %v479
    %v497 = vunpack.c.l.b16 %v460
    %v498 = vunpack.c.l.b16 %v461
    %v499 = vunpack.c.l.b16 %v462
    %v500 = vunpack.c.l.b16 %v463
    %v501 = vunpack.c.l.b16 %v464
    %v502 = vunpack.c.l.b16 %v465
    %v503 = vunpack.c.l.b16 %v466
    %v504 = vunpack.c.l.b16 %v467
    %v505 = vunpack.c.l.b16 %v468
    %v506 = vunpack.c.l.b16 %v469
    %v507 = vunpack.c.l.b16 %v470
    %v508 = vunpack.c.l.b16 %v471
    %v509 = vunpack.c.l.b16 %v472
    %v510 = vunpack.c.l.b16 %v473
    %v511 = vunpack.c.l.b16 %v474
    %v512 = vunpack.c.l.b16 %v475
    %v513 = vpack.c.b16 %v498, %v497
    %v514 = vpack.c.b16 %v500, %v499
    %v515 = vpack.c.b16 %v502, %v501
    %v516 = vpack.c.b16 %v504, %v503
    %v517 = vpack.c.b16 %v506, %v505
    %v518 = vpack.c.b16 %v508, %v507
    %v519 = vpack.c.b16 %v510, %v509
    %v520 = vpack.c.b16 %v512, %v511
    %529 = vmatprep.subr.bf16.mxu0 0
    %530 = vmatpush1.bf16.msra.mxu0 %v513
    %531 = vmatprep.subr.bf16.mxu0 0
    %532 = vmatpush1.bf16.msra.mxu0 %v514
    %533 = vmatprep.subr.bf16.mxu0 0
    %534 = vmatpush1.bf16.msra.mxu0 %v515
    %535 = vmatprep.subr.bf16.mxu0 0
    %536 = vmatpush1.bf16.msra.mxu0 %v516
    %537 = vmatprep.subr.bf16.mxu0 0
    %538 = vmatpush1.bf16.msra.mxu0 %v517
    %539 = vmatprep.subr.bf16.mxu0 0
    %540 = vmatpush1.bf16.msra.mxu0 %v518
    %541 = vmatprep.subr.bf16.mxu0 0
    %542 = vmatpush1.bf16.msra.mxu0 %v519
    %543 = vmatprep.subr.bf16.mxu0 0
    %544 = vmatpush1.bf16.msra.mxu0 %v520
    %545 = vmatprep.subr.bf16.mxu0 0
    %546 = vmatpush1.bf16.msra.mxu0 0
    %547 = vmatprep.subr.bf16.mxu0 0
    %548 = vmatpush1.bf16.msra.mxu0 0
    %549 = vmatprep.subr.bf16.mxu0 0
    %550 = vmatpush1.bf16.msra.mxu0 0
    %551 = vmatprep.subr.bf16.mxu0 0
    %552 = vmatpush1.bf16.msra.mxu0 0
    %553 = vmatprep.subr.bf16.mxu0 0
    %554 = vmatpush1.bf16.msra.mxu0 0
    %555 = vmatprep.subr.bf16.mxu0 0
    %556 = vmatpush1.bf16.msra.mxu0 0
    %557 = vmatprep.subr.bf16.mxu0 0
    %558 = vmatpush1.bf16.msra.mxu0 0
    %559 = vmatprep.subr.bf16.mxu0 0
    %560 = vmatpush1.bf16.msra.mxu0 0
    %561 = vmatprep.mubr.bf16.mxu0 0
    %562 = vmatmul.mubr.bf16.gmra.mrb[0].mxu0 %v459
    %v563 = vpop.f32.mrb[0].mxu0
    %v564 = vadd.f32 %v480, %v563
    %v565 = vpop.f32.mrb[0].mxu0
    %v566 = vpop.f32.mrb[0].mxu0
    %v567 = vpop.f32.mrb[0].mxu0
    %568 = vdwg.mxu0
    %v569 = vlaneseq
    %v570 = vand.u32 %v569, 127
    %vm571 = vcmp.lt.s32.totalorder %v570, 4
    %v572 = vsel %vm571, %v564, -3.4028235e+38
    %573 = vst [vmem:[#allocation10] sm:$0xff] %v572
    // Predicated region
    $region34: #{tpu_custom_call.1} parent=1 // pred_check
      _
    $region35: #{tpu_custom_call.1} parent=1 // pred_check_branch
      %575 = sbr.rel (0) target = $region37
    $region36: #{tpu_custom_call.1} parent=1 // pred_region
      %s577 = ssub.s32 128, 128
      %578 = vsyncadd [#allocation4], %s577
      %s580 = sshll.u32 [#allocation10], 4
      %s581 = int_to_ptr.vmem [resolvable:$true] %s580
      %583 = dma.vmem_to_hbm [thread:$0]  %s581, 128, %s4, [#allocation4]
    $region37: #{tpu_custom_call.1} parent=1 // pred_fallthru
      _
    // Predicated region
    $region38: #{tpu_custom_call.1} parent=1 // pred_check
      _
    $region39: #{tpu_custom_call.1} parent=1 // pred_check_branch
      %585 = sbr.rel (0) target = $region41
    $region40: #{tpu_custom_call.1} parent=1 // pred_region
      %586 = dma.done [#allocation4], 128
    $region41: #{tpu_custom_call.1} parent=1 // pred_fallthru
      _
    %587 = vsyncpa [#allocation3], 1
    %588 = vsyncpa [#allocation6], 1
    %589 = vsyncpa [#allocation9], 1
    %590 = vsyncpa [#allocation4], 1

</llo_original>
